<compile_context>
chip_gen: v7x
topology: tpu7x:2x2x1
jax: 0.10.0
libtpu: 0.0.40
codegen_flags: <defaults>
</compile_context>

<pallas_src>
import jax
import jax.numpy as jnp
from jax.experimental import pallas as pl
from jax.experimental.pallas import tpu as pltpu


def spatial_attention_kernel(x_ref, b_ref, o_ref, pad_ref):
    # x_ref:   (TN, C, H, W)   TN images of the grid step
    # b_ref:   (2, 3, W, W)    banded column-tap matrices (grid-invariant)
    # o_ref:   (TN, H, W)      output block (singleton conv channel squeezed)
    # pad_ref: (2*TN, H+2, W)  f32 row-halo scratch ([avg; max] with zero borders)
    tn, c_in, H, W = x_ref.shape

    # --- single pass over C: each channel is loaded once and feeds both the
    #     running sum (f32) and the running max ---
    x0 = x_ref[:, 0, :, :].astype(jnp.float32)
    s, mx = x0, x0
    for c in range(1, c_in):                     # small static C -> straight-line code
        xc = x_ref[:, c, :, :].astype(jnp.float32)
        s = s + xc
        mx = jnp.maximum(mx, xc)
    avg = s * (1.0 / c_in)

    # --- zero-padded row halo: rows 0 and H+1 stay zero, interior holds the maps.
    #     Sublane-offset stores/loads replace the old A-matrix matmuls. ---
    pad_ref[...] = jnp.zeros_like(pad_ref)
    pad_ref[0:tn, 1:H + 1, :] = avg
    pad_ref[tn:2 * tn, 1:H + 1, :] = mx

    # --- 3x3 conv: vertical taps = static sublane-offset slices of the halo
    #     scratch (XLU/vld work, no MXU inflation); horizontal taps = one banded
    #     (W, W) right-multiply per (map, kh): 6 dots of shape (TN*H, W) x (W, W). ---
    acc = jnp.zeros((tn * H, W), jnp.float32)
    for c in range(2):
        for kh in range(3):
            slab = pad_ref[c * tn:(c + 1) * tn, kh:kh + H, :].reshape(tn * H, W)
            acc = acc + jnp.dot(slab, b_ref[c, kh],
                                preferred_element_type=jnp.float32)
    o_ref[...] = jax.nn.sigmoid(acc).reshape(tn, H, W).astype(o_ref.dtype)


def _round_up(v, m):
    return -(-v // m) * m


@jax.jit
def spatial_attention(x, weight):
    """x: (N, C, H, W); weight: (1, 2, 3, 3) Conv2d weight (no bias) -> (N, 1, H, W)."""
    N, C, H, W = x.shape
    w3 = weight.reshape(2, 3, 3).astype(jnp.float32)

    # Banded column-tap matrices: (M @ B[c,kh])[y,x] = sum_kw w[c,kh,kw] * M[y, x+kw-1]
    # with zero padding; B[c, kh, j, x] = w3[c, kh, j - x + 1] for |j - x| <= 1.
    col = jnp.arange(W)
    diff = col[:, None] - col[None, :] + 1                       # (W, W)
    band = (diff >= 0) & (diff <= 2)
    b_mats = jnp.where(band[None, None],
                       w3[:, :, jnp.clip(diff, 0, 2)], 0.0)      # (2, 3, W, W)

    # Batch several images per grid step: keep the (tile-padded) x block a few MiB
    # but keep >=2 grid steps whenever N >= 2 so both v7x TensorCores get work.
    itemsize = x.dtype.itemsize
    img_bytes = C * _round_up(H, 8) * _round_up(W, 128) * itemsize
    tn = 1
    for d in range(1, N + 1):
        if N % d == 0 and d * img_bytes <= (4 << 20) and (N // d >= 2 or N == 1):
            tn = d
    grid = (N // tn,)

    # Explicit VMEM budget: double-buffered x/out/B blocks + halo scratch (tile
    # padded), so pipelining stays alive on v5e (16 MiB scoped default) and v7x
    # (64 MiB physical / 32 MiB scoped default).
    blk_x = 2 * tn * C * _round_up(H, 8) * _round_up(W, 128) * itemsize
    blk_o = 2 * tn * _round_up(H, 8) * _round_up(W, 128) * itemsize
    blk_b = 2 * 2 * 3 * _round_up(W, 8) * _round_up(W, 128) * 4
    scr_b = 2 * tn * _round_up(H + 2, 8) * _round_up(W, 128) * 4
    vmem_limit = int(min(max(blk_x + blk_o + blk_b + scr_b + (2 << 20), 4 << 20),
                         64 << 20))

    # Advisory: this op is HBM-bandwidth-bound.
    cost = pl.CostEstimate(
        flops=int(N * H * W * (2 * C + 36)),
        transcendentals=int(N * H * W),
        bytes_accessed=int(N * C * H * W * itemsize + N * H * W * itemsize
                           + 2 * 3 * W * W * 4))

    return pl.pallas_call(
        spatial_attention_kernel,
        out_shape=jax.ShapeDtypeStruct((N, 1, H, W), x.dtype),
        grid_spec=pltpu.PrefetchScalarGridSpec(
            num_scalar_prefetch=0,
            grid=grid,
            in_specs=[
                pl.BlockSpec((tn, C, H, W), lambda n: (n, 0, 0, 0)),
                # B is grid-invariant (constant index map) so it is only DMA'd once.
                # TODO(synk): pipeline_mode=pl.Buffered(1) would also drop its second
                # VMEM buffer; left at the default to keep lowering conservative.
                pl.BlockSpec((2, 3, W, W), lambda n: (0, 0, 0, 0)),
            ],
            out_specs=pl.BlockSpec((tn, None, H, W), lambda n: (n, 0, 0, 0)),
            scratch_shapes=[pltpu.VMEM((2 * tn, H + 2, W), jnp.float32)],
        ),
        compiler_params=pltpu.CompilerParams(
            dimension_semantics=("parallel",),
            vmem_limit_bytes=vmem_limit),
        cost_estimate=cost,
        # NOTE: for very large C*H*W, add a second ("arbitrary") grid axis over C
        # (running sum/max scratch + conv under pl.when on the last C step) so the
        # x block stays <= ~8 MiB; W < 128 outputs could additionally be relaid out
        # lane-dense, at the cost of an extra HBM pass in the wrapper.
    )(x, b_mats)


def _reference(x, weight):
    # Exact f32 elementwise reference: mean/max -> zero-padded 3x3 conv -> sigmoid.
    N, C, H, W = x.shape
    avg = jnp.mean(x, axis=1, keepdims=True)
    mx = jnp.max(x, axis=1, keepdims=True)
    m = jnp.concatenate([avg, mx], axis=1)                  # (N, 2, H, W)
    mp = jnp.pad(m, ((0, 0), (0, 0), (1, 1), (1, 1)))
    out = jnp.zeros((N, 1, H, W), jnp.float32)
    for c in range(2):
        for i in range(3):
            for j in range(3):
                out = out + weight[0, c, i, j] * mp[:, c:c + 1, i:i + H, j:j + W]
    return jax.nn.sigmoid(out)


if __name__ == "__main__":
    N, C, H, W = 2, 4, 16, 16

    key = jax.random.PRNGKey(0)
    kx, kw = jax.random.split(key, 2)
    x = jax.random.normal(kx, (N, C, H, W), dtype=jnp.float32)

    # Conv2d(2, 1, 3, padding=1, bias=False) default init: U(+-1/sqrt(fan_in))
    fan_in = 2 * 3 * 3
    bound = 1.0 / (fan_in ** 0.5)
    weight = jax.random.uniform(kw, (1, 2, 3, 3), jnp.float32, -bound, bound)

    out = spatial_attention(x, weight)
    jax.block_until_ready(out)

    ref = _reference(x, weight)
    assert out.shape == (N, 1, H, W)
    # Tolerance leaves headroom for the reduced-precision f32 MXU passes of the
    # banded column-tap dots vs. the exact elementwise reference.
    assert jnp.allclose(out, ref, atol=5e-3, rtol=0.0), float(jnp.max(jnp.abs(out - ref)))

    print("KERNEL_OK")
</pallas_src>

<mosaic_0001>
module attributes {stable_mosaic.version = 11 : i64} {
  func.func @spatial_attention_kernel(%arg0: i32, %arg1: memref<1x4x16x16xf32, #tpu.memory_space<vmem>>, %arg2: memref<2x3x16x16xf32, #tpu.memory_space<vmem>>, %arg3: memref<1x1x16x16xf32, #tpu.memory_space<vmem>>, %arg4: memref<2x18x16xf32, #tpu.memory_space<vmem>>) attributes {dimension_semantics = [#tpu.dimension_semantics<parallel>], iteration_bounds = array<i64: 2>, scalar_prefetch = 0 : i64, scratch_operands = 1 : i64, tpu.core_type = #tpu.core_type<tc>, window_params = [{transform_indices = @transform_0, window_bounds = array<i64: 1, 4, 16, 16>}, {pipeline_mode = #tpu.pipeline_mode<synchronous>, transform_indices = @transform_1, window_bounds = array<i64: 2, 3, 16, 16>}, {transform_indices = @transform_2, window_bounds = array<i64: 1, 1, 16, 16>}]} {
    %c0 = arith.constant 0 : index
    %c0_0 = arith.constant 0 : index
    %c0_1 = arith.constant 0 : index
    %c0_2 = arith.constant 0 : index
    %0 = vector.load %arg1[%c0, %c0_0, %c0_1, %c0_2] : memref<1x4x16x16xf32, #tpu.memory_space<vmem>>, vector<1x1x16x16xf32>
    %1 = vector.shape_cast %0 : vector<1x1x16x16xf32> to vector<1x16x16xf32>
    %c0_3 = arith.constant 0 : index
    %c1 = arith.constant 1 : index
    %c0_4 = arith.constant 0 : index
    %c0_5 = arith.constant 0 : index
    %2 = vector.load %arg1[%c0_3, %c1, %c0_4, %c0_5] : memref<1x4x16x16xf32, #tpu.memory_space<vmem>>, vector<1x1x16x16xf32>
    %3 = vector.shape_cast %2 : vector<1x1x16x16xf32> to vector<1x16x16xf32>
    %4 = arith.addf %1, %3 : vector<1x16x16xf32>
    %5 = arith.maximumf %1, %3 : vector<1x16x16xf32>
    %c0_6 = arith.constant 0 : index
    %c2 = arith.constant 2 : index
    %c0_7 = arith.constant 0 : index
    %c0_8 = arith.constant 0 : index
    %6 = vector.load %arg1[%c0_6, %c2, %c0_7, %c0_8] : memref<1x4x16x16xf32, #tpu.memory_space<vmem>>, vector<1x1x16x16xf32>
    %7 = vector.shape_cast %6 : vector<1x1x16x16xf32> to vector<1x16x16xf32>
    %8 = arith.addf %4, %7 : vector<1x16x16xf32>
    %9 = arith.maximumf %5, %7 : vector<1x16x16xf32>
    %c0_9 = arith.constant 0 : index
    %c3 = arith.constant 3 : index
    %c0_10 = arith.constant 0 : index
    %c0_11 = arith.constant 0 : index
    %10 = vector.load %arg1[%c0_9, %c3, %c0_10, %c0_11] : memref<1x4x16x16xf32, #tpu.memory_space<vmem>>, vector<1x1x16x16xf32>
    %11 = vector.shape_cast %10 : vector<1x1x16x16xf32> to vector<1x16x16xf32>
    %12 = arith.addf %8, %11 : vector<1x16x16xf32>
    %13 = arith.maximumf %9, %11 : vector<1x16x16xf32>
    %cst = arith.constant 2.500000e-01 : f32
    %14 = vector.broadcast %cst : f32 to vector<1x16x16xf32>
    %15 = arith.mulf %12, %14 : vector<1x16x16xf32>
    %cst_12 = arith.constant 0.000000e+00 : f32
    %16 = vector.broadcast %cst_12 : f32 to vector<2x18x16xf32>
    %c0_13 = arith.constant 0 : index
    %c0_14 = arith.constant 0 : index
    %c0_15 = arith.constant 0 : index
    %17 = vector.load %arg4[%c0_13, %c0_14, %c0_15] : memref<2x18x16xf32, #tpu.memory_space<vmem>>, vector<2x18x16xf32>
    tpu.vector_store %arg4[%c0_13, %c0_14, %c0_15], %16 {strides = array<i32>} : memref<2x18x16xf32, #tpu.memory_space<vmem>>, vector<2x18x16xf32>,
    %c0_16 = arith.constant 0 : index
    %c1_17 = arith.constant 1 : index
    %c0_18 = arith.constant 0 : index
    %18 = vector.load %arg4[%c0_16, %c1_17, %c0_18] : memref<2x18x16xf32, #tpu.memory_space<vmem>>, vector<1x16x16xf32>
    tpu.vector_store %arg4[%c0_16, %c1_17, %c0_18], %15 {strides = array<i32>} : memref<2x18x16xf32, #tpu.memory_space<vmem>>, vector<1x16x16xf32>,
    %c1_19 = arith.constant 1 : index
    %c1_20 = arith.constant 1 : index
    %c0_21 = arith.constant 0 : index
    %19 = vector.load %arg4[%c1_19, %c1_20, %c0_21] : memref<2x18x16xf32, #tpu.memory_space<vmem>>, vector<1x16x16xf32>
    tpu.vector_store %arg4[%c1_19, %c1_20, %c0_21], %13 {strides = array<i32>} : memref<2x18x16xf32, #tpu.memory_space<vmem>>, vector<1x16x16xf32>,
    %cst_22 = arith.constant 0.000000e+00 : f32
    %20 = vector.broadcast %cst_22 : f32 to vector<16x16xf32>
    %c0_23 = arith.constant 0 : index
    %c0_24 = arith.constant 0 : index
    %c0_25 = arith.constant 0 : index
    %21 = vector.load %arg4[%c0_23, %c0_24, %c0_25] : memref<2x18x16xf32, #tpu.memory_space<vmem>>, vector<1x16x16xf32>
    %22 = vector.shape_cast %21 : vector<1x16x16xf32> to vector<16x16xf32>
    %c0_26 = arith.constant 0 : index
    %c0_27 = arith.constant 0 : index
    %c0_28 = arith.constant 0 : index
    %c0_29 = arith.constant 0 : index
    %23 = vector.load %arg2[%c0_26, %c0_27, %c0_28, %c0_29] : memref<2x3x16x16xf32, #tpu.memory_space<vmem>>, vector<1x1x16x16xf32>
    %24 = vector.shape_cast %23 : vector<1x1x16x16xf32> to vector<16x16xf32>
    %cst_30 = arith.constant dense<0.000000e+00> : vector<16x16xf32>
    %25 = tpu.matmul %22, %24, %cst_30 {dimension_numbers = #tpu.dot_dimension_numbers<[1], [0], [0], [1], [0, 0, 1, 1], [], []>} : vector<16x16xf32>, vector<16x16xf32>, vector<16x16xf32> -> vector<16x16xf32>
    %26 = arith.addf %20, %25 : vector<16x16xf32>
    %c0_31 = arith.constant 0 : index
    %c1_32 = arith.constant 1 : index
    %c0_33 = arith.constant 0 : index
    %27 = vector.load %arg4[%c0_31, %c1_32, %c0_33] : memref<2x18x16xf32, #tpu.memory_space<vmem>>, vector<1x16x16xf32>
    %28 = vector.shape_cast %27 : vector<1x16x16xf32> to vector<16x16xf32>
    %c0_34 = arith.constant 0 : index
    %c1_35 = arith.constant 1 : index
    %c0_36 = arith.constant 0 : index
    %c0_37 = arith.constant 0 : index
    %29 = vector.load %arg2[%c0_34, %c1_35, %c0_36, %c0_37] : memref<2x3x16x16xf32, #tpu.memory_space<vmem>>, vector<1x1x16x16xf32>
    %30 = vector.shape_cast %29 : vector<1x1x16x16xf32> to vector<16x16xf32>
    %cst_38 = arith.constant dense<0.000000e+00> : vector<16x16xf32>
    %31 = tpu.matmul %28, %30, %cst_38 {dimension_numbers = #tpu.dot_dimension_numbers<[1], [0], [0], [1], [0, 0, 1, 1], [], []>} : vector<16x16xf32>, vector<16x16xf32>, vector<16x16xf32> -> vector<16x16xf32>
    %32 = arith.addf %26, %31 : vector<16x16xf32>
    %c0_39 = arith.constant 0 : index
    %c2_40 = arith.constant 2 : index
    %c0_41 = arith.constant 0 : index
    %33 = vector.load %arg4[%c0_39, %c2_40, %c0_41] : memref<2x18x16xf32, #tpu.memory_space<vmem>>, vector<1x16x16xf32>
    %34 = vector.shape_cast %33 : vector<1x16x16xf32> to vector<16x16xf32>
    %c0_42 = arith.constant 0 : index
    %c2_43 = arith.constant 2 : index
    %c0_44 = arith.constant 0 : index
    %c0_45 = arith.constant 0 : index
    %35 = vector.load %arg2[%c0_42, %c2_43, %c0_44, %c0_45] : memref<2x3x16x16xf32, #tpu.memory_space<vmem>>, vector<1x1x16x16xf32>
    %36 = vector.shape_cast %35 : vector<1x1x16x16xf32> to vector<16x16xf32>
    %cst_46 = arith.constant dense<0.000000e+00> : vector<16x16xf32>
    %37 = tpu.matmul %34, %36, %cst_46 {dimension_numbers = #tpu.dot_dimension_numbers<[1], [0], [0], [1], [0, 0, 1, 1], [], []>} : vector<16x16xf32>, vector<16x16xf32>, vector<16x16xf32> -> vector<16x16xf32>
    %38 = arith.addf %32, %37 : vector<16x16xf32>
    %c1_47 = arith.constant 1 : index
    %c0_48 = arith.constant 0 : index
    %c0_49 = arith.constant 0 : index
    %39 = vector.load %arg4[%c1_47, %c0_48, %c0_49] : memref<2x18x16xf32, #tpu.memory_space<vmem>>, vector<1x16x16xf32>
    %40 = vector.shape_cast %39 : vector<1x16x16xf32> to vector<16x16xf32>
    %c1_50 = arith.constant 1 : index
    %c0_51 = arith.constant 0 : index
    %c0_52 = arith.constant 0 : index
    %c0_53 = arith.constant 0 : index
    %41 = vector.load %arg2[%c1_50, %c0_51, %c0_52, %c0_53] : memref<2x3x16x16xf32, #tpu.memory_space<vmem>>, vector<1x1x16x16xf32>
    %42 = vector.shape_cast %41 : vector<1x1x16x16xf32> to vector<16x16xf32>
    %cst_54 = arith.constant dense<0.000000e+00> : vector<16x16xf32>
    %43 = tpu.matmul %40, %42, %cst_54 {dimension_numbers = #tpu.dot_dimension_numbers<[1], [0], [0], [1], [0, 0, 1, 1], [], []>} : vector<16x16xf32>, vector<16x16xf32>, vector<16x16xf32> -> vector<16x16xf32>
    %44 = arith.addf %38, %43 : vector<16x16xf32>
    %c1_55 = arith.constant 1 : index
    %c1_56 = arith.constant 1 : index
    %c0_57 = arith.constant 0 : index
    %45 = vector.load %arg4[%c1_55, %c1_56, %c0_57] : memref<2x18x16xf32, #tpu.memory_space<vmem>>, vector<1x16x16xf32>
    %46 = vector.shape_cast %45 : vector<1x16x16xf32> to vector<16x16xf32>
    %c1_58 = arith.constant 1 : index
    %c1_59 = arith.constant 1 : index
    %c0_60 = arith.constant 0 : index
    %c0_61 = arith.constant 0 : index
    %47 = vector.load %arg2[%c1_58, %c1_59, %c0_60, %c0_61] : memref<2x3x16x16xf32, #tpu.memory_space<vmem>>, vector<1x1x16x16xf32>
    %48 = vector.shape_cast %47 : vector<1x1x16x16xf32> to vector<16x16xf32>
    %cst_62 = arith.constant dense<0.000000e+00> : vector<16x16xf32>
    %49 = tpu.matmul %46, %48, %cst_62 {dimension_numbers = #tpu.dot_dimension_numbers<[1], [0], [0], [1], [0, 0, 1, 1], [], []>} : vector<16x16xf32>, vector<16x16xf32>, vector<16x16xf32> -> vector<16x16xf32>
    %50 = arith.addf %44, %49 : vector<16x16xf32>
    %c1_63 = arith.constant 1 : index
    %c2_64 = arith.constant 2 : index
    %c0_65 = arith.constant 0 : index
    %51 = vector.load %arg4[%c1_63, %c2_64, %c0_65] : memref<2x18x16xf32, #tpu.memory_space<vmem>>, vector<1x16x16xf32>
    %52 = vector.shape_cast %51 : vector<1x16x16xf32> to vector<16x16xf32>
    %c1_66 = arith.constant 1 : index
    %c2_67 = arith.constant 2 : index
    %c0_68 = arith.constant 0 : index
    %c0_69 = arith.constant 0 : index
    %53 = vector.load %arg2[%c1_66, %c2_67, %c0_68, %c0_69] : memref<2x3x16x16xf32, #tpu.memory_space<vmem>>, vector<1x1x16x16xf32>
    %54 = vector.shape_cast %53 : vector<1x1x16x16xf32> to vector<16x16xf32>
    %cst_70 = arith.constant dense<0.000000e+00> : vector<16x16xf32>
    %55 = tpu.matmul %52, %54, %cst_70 {dimension_numbers = #tpu.dot_dimension_numbers<[1], [0], [0], [1], [0, 0, 1, 1], [], []>} : vector<16x16xf32>, vector<16x16xf32>, vector<16x16xf32> -> vector<16x16xf32>
    %56 = arith.addf %50, %55 : vector<16x16xf32>
    %57 = arith.negf %56 : vector<16x16xf32>
    %58 = math.exp %57 : vector<16x16xf32>
    %cst_71 = arith.constant 1.000000e+00 : f32
    %59 = vector.broadcast %cst_71 : f32 to vector<16x16xf32>
    %60 = arith.addf %59, %58 : vector<16x16xf32>
    %61 = arith.divf %59, %60 : vector<16x16xf32>
    %62 = vector.shape_cast %61 : vector<16x16xf32> to vector<1x16x16xf32>
    %c0_72 = arith.constant 0 : index
    %c0_73 = arith.constant 0 : index
    %c0_74 = arith.constant 0 : index
    %c0_75 = arith.constant 0 : index
    %63 = vector.load %arg3[%c0_72, %c0_73, %c0_74, %c0_75] : memref<1x1x16x16xf32, #tpu.memory_space<vmem>>, vector<1x1x16x16xf32>
    %64 = vector.shape_cast %63 : vector<1x1x16x16xf32> to vector<1x16x16xf32>
    %65 = vector.shape_cast %62 : vector<1x16x16xf32> to vector<1x1x16x16xf32>
    tpu.vector_store %arg3[%c0_72, %c0_73, %c0_74, %c0_75], %65 {strides = array<i32>} : memref<1x1x16x16xf32, #tpu.memory_space<vmem>>, vector<1x1x16x16xf32>,
    return
  }
  func.func @transform_0(%arg0: i32) -> (i32, i32, i32, i32) {
    %c0_i32 = arith.constant 0 : i32
    %c0_i32_0 = arith.constant 0 : i32
    %c0_i32_1 = arith.constant 0 : i32
    %c0_i32_2 = arith.constant 0 : i32
    return %arg0, %c0_i32, %c0_i32_0, %c0_i32_1 : i32, i32, i32, i32
  }
  func.func @transform_1(%arg0: i32) -> (i32, i32, i32, i32) {
    %c0_i32 = arith.constant 0 : i32
    %c0_i32_0 = arith.constant 0 : i32
    %c0_i32_1 = arith.constant 0 : i32
    %c0_i32_2 = arith.constant 0 : i32
    %c0_i32_3 = arith.constant 0 : i32
    return %c0_i32, %c0_i32_0, %c0_i32_1, %c0_i32_2 : i32, i32, i32, i32
  }
  func.func @transform_2(%arg0: i32) -> (i32, i32, i32, i32) {
    %c0_i32 = arith.constant 0 : i32
    %c0_i32_0 = arith.constant 0 : i32
    %c0_i32_1 = arith.constant 0 : i32
    %c0_i32_2 = arith.constant 0 : i32
    return %arg0, %c0_i32, %c0_i32_0, %c0_i32_1 : i32, i32, i32, i32
  }
}

</mosaic_0001>

<llo_original>
// kernel: spatial_attention.1
$region0: #{spatial_attention.1}
  #allocation0 [shape = 'u32[]', space=smem, size = 0x4, offset = 0x4, fixed_abs, tag = 'smem constant byte address 0x4 - core index']
  #allocation1 [shape = 'u32[144,128]{1,0:T(1,128)}', space=vmem, size = 0x12000, scoped, tag = 'internal scratch']
  #allocation2 [shape = 'f32[2,18,16]{2,1,0:T(8,128)}', space=vmem, size = 0x6000, scoped, tag = 'scratch operand']
  %s0 = inlined_call_operand.vmem [shape: f32[2,4,16,16], index: 0, kind: input, shape index: {}]
  %s1 = inlined_call_operand.vmem [shape: f32[2,3,16,16], index: 1, kind: input, shape index: {}]
  %s2 = inlined_call_operand.hbm [shape: f32[2,1,16,16], index: 2, kind: output, shape index: {}]
  %s3 = sld [smem:[#allocation0]]
  $region41: #{spatial_attention.1} parent=0
    _
  %s5 = ssub.s32 1, %s3
  %s6 = scalar_select 0, %s5, %s3
  $region1: #{spatial_attention.1} parent=0
    #allocation3 [shape = 'u8[16384]{0}', space=vmem, size = 0x4000, scoped, tag = 'output window, operand 0']
    #allocation4 [shape = 's32[2]{0}', space=sflag, size = 0x8, scoped, tag = 'scoped memory for spatial_attention.1']
    %7 = vsyncpa [#allocation4], 0
    %s8 = scalar_lea.sflag [#allocation4], 1
    %9 = vsyncpa %s8, 0
    loop: start=0, step=1, limit=4
    $region2: #{spatial_attention.1} parent=1 // loop_pre_header
      _
    $region3: #{spatial_attention.1} parent=1 // loop_header
      %s11 = sphi 0, %s15
      %p12 = scmp.ge.s32.totalorder %s11, 4
      %s21 = sphi 0, %s23
      %s24 = sphi 0, %s21
      %s25 = sphi 0, %s24
      %s41 = sphi 0, %s25
      %s45 = sphi 0, %s45
      %s47 = sphi 0, %s45
      %s48 = sphi 0, %s47
      %s62 = sphi 0, %s48
      %s68 = sphi 0, %s70
      %s71 = sphi 0, %s68
      %s72 = sphi 0, %s71
      %s88 = sphi 0, %s72
    $region4: #{spatial_attention.1} parent=1 // loop_header_branch
      %14 = sbr.rel (%p12) target = $region8
    $region5: #{spatial_attention.1} parent=1 // loop_body
      %s16 = ssub.s32 %s11, 1
      %s17 = ssub.s32 %s11, 2
      %s18 = sadd.s32 %s11, 1
      %s19 = ssub.s32 %s11, %s18
      %p20 = scmp.eq.s32.totalorder %s19, 0
      %s22 = sadd.s32 %s21, 1
      %s23 = scalar_select %p20, %s21, %s22
      %p26 = pneg %p20
      %p27 = scmp.eq.s32.totalorder %s11, 1
      %p28 = por %p26, %p27
      %p29 = scmp.ne.s32.totalorder %s21, %s24
      %p30 = scmp.eq.s32.totalorder %s11, 0
      %p31 = por %p29, %p30
      %p32 = scmp.ne.s32.totalorder %s21, %s24
      %p33 = scmp.eq.s32.totalorder %s16, 1
      %p34 = por %p32, %p33
      %p35 = scmp.ne.s32.totalorder %s24, %s25
      %p36 = scmp.eq.s32.totalorder %s16, 0
      %p37 = por %p35, %p36
      %p38 = scmp.ne.s32.totalorder %s24, %s25
      %p39 = scmp.eq.s32.totalorder %s17, 1
      %p40 = por %p38, %p39
      %p42 = scmp.ne.s32.totalorder %s25, %s41
      %p43 = scmp.eq.s32.totalorder %s17, 0
      %p44 = por %p42, %p43
      %s46 = sadd.s32 %s45, 1
      %p49 = scmp.eq.s32.totalorder %s11, 1
      %p50 = scmp.ne.s32.totalorder %s45, %s47
      %p51 = scmp.eq.s32.totalorder %s11, 0
      %p52 = por %p50, %p51
      %p53 = scmp.ne.s32.totalorder %s45, %s47
      %p54 = scmp.eq.s32.totalorder %s16, 1
      %p55 = por %p53, %p54
      %p56 = scmp.ne.s32.totalorder %s47, %s48
      %p57 = scmp.eq.s32.totalorder %s16, 0
      %p58 = por %p56, %p57
      %p59 = scmp.ne.s32.totalorder %s47, %s48
      %p60 = scmp.eq.s32.totalorder %s17, 1
      %p61 = por %p59, %p60
      %p63 = scmp.ne.s32.totalorder %s48, %s62
      %p64 = scmp.eq.s32.totalorder %s17, 0
      %p65 = por %p63, %p64
      %s66 = ssub.s32 %s11, %s18
      %p67 = scmp.eq.s32.totalorder %s66, 0
      %s69 = sadd.s32 %s68, 1
      %s70 = scalar_select %p67, %s68, %s69
      %p73 = pneg %p67
      %p74 = scmp.eq.s32.totalorder %s11, 1
      %p75 = por %p73, %p74
      %p76 = scmp.ne.s32.totalorder %s68, %s71
      %p77 = scmp.eq.s32.totalorder %s11, 0
      %p78 = por %p76, %p77
      %p79 = scmp.ne.s32.totalorder %s68, %s71
      %p80 = scmp.eq.s32.totalorder %s16, 1
      %p81 = por %p79, %p80
      %p82 = scmp.ne.s32.totalorder %s71, %s72
      %p83 = scmp.eq.s32.totalorder %s16, 0
      %p84 = por %p82, %p83
      %p85 = scmp.ne.s32.totalorder %s71, %s72
      %p86 = scmp.eq.s32.totalorder %s17, 1
      %p87 = por %p85, %p86
      %p89 = scmp.ne.s32.totalorder %s72, %s88
      %p90 = scmp.eq.s32.totalorder %s17, 0
      %p91 = por %p89, %p90
      %p92 = scmp.le.s32.totalorder 1, %s11
      %p93 = scmp.lt.s32.totalorder %s11, 3
      %p94 = pnand %p92, %p93
      %p95 = pneg %p94
      // Predicated region
      $region9: #{spatial_attention.1} parent=5 // pred_check
        _
      $region10: #{spatial_attention.1} parent=5 // pred_check_branch
        %97 = sbr.rel (%p94) target = $region12
      $region11: #{spatial_attention.1} parent=5 // pred_region
        %s98 = ssub.s32 %s11, 1
        // Predicated region
        $region13: #{spatial_attention.1} parent=11 // pred_check
          %p99 = pneg %p58
        $region14: #{spatial_attention.1} parent=11 // pred_check_branch
          %101 = sbr.rel (%p99) target = $region16
        $region15: #{spatial_attention.1} parent=11 // pred_region
          _
        $region16: #{spatial_attention.1} parent=11 // pred_fallthru
          _
      $region12: #{spatial_attention.1} parent=5 // pred_fallthru
        _
      %p102 = scmp.lt.s32.totalorder %s11, 2
      // Predicated region
      $region17: #{spatial_attention.1} parent=5 // pred_check
        %p103 = pneg %p102
      $region18: #{spatial_attention.1} parent=5 // pred_check_branch
        %105 = sbr.rel (%p103) target = $region20
      $region19: #{spatial_attention.1} parent=5 // pred_region
        // Predicated region
        $region21: #{spatial_attention.1} parent=19 // pred_check
          %p106 = pneg %p31
        $region22: #{spatial_attention.1} parent=19 // pred_check_branch
          %108 = sbr.rel (%p106) target = $region24
        $region23: #{spatial_attention.1} parent=19 // pred_region
          %p109 = scmp.lt.s32.totalorder %s11, 1
          %s110 = scalar_select %p109, %s11, 1
          %s111 = smul.addr %s110, 8
          %s112 = smul.addr %s111, 8
          %s113 = scalar_lea.vmem %s0, %s112
        $region24: #{spatial_attention.1} parent=19 // pred_fallthru
          _
      $region20: #{spatial_attention.1} parent=5 // pred_fallthru
        _
      %p114 = scmp.le.s32.totalorder 1, %s11
      %p115 = scmp.lt.s32.totalorder %s11, 3
      %p116 = pnand %p114, %p115
      %p117 = pneg %p116
      // Predicated region
      $region25: #{spatial_attention.1} parent=5 // pred_check
        _
      $region26: #{spatial_attention.1} parent=5 // pred_check_branch
        %119 = sbr.rel (%p116) target = $region28
      $region27: #{spatial_attention.1} parent=5 // pred_region
        %s120 = ssub.s32 %s11, 1
        %p121 = scmp.lt.s32.totalorder %s16, 1
        %s122 = scalar_select %p121, %s16, 1
        %s123 = smul.addr %s122, 8
        %s124 = smul.addr %s123, 8
        %s125 = scalar_lea.vmem %s0, %s124
        %p126 = pneg %p37
        %p127 = pneg %p34
        %p128 = pneg %p58
        %p129 = pneg %p55
        %p130 = pneg %p84
        %p131 = pneg %p81
        %s132 = sand.u32 %s71, 1
        %s133 = scalar_lea.sflag [#allocation4], %s132
        %s134 = sand.u32 %s71, 1
        %s135 = smul.addr %s134, 16
        %s136 = scalar_lea.vmem [#allocation3], %s135
        %p137 = scmp.lt.s32.totalorder %s16, 1
        %s138 = scalar_select %p137, %s16, 1
        %s139 = smul.addr %s138, 8
        %s140 = smul.addr %s139, 8
        %s141 = scalar_lea.vmem %s0, %s140
        %v142 = vld [vmem:[%s141] sm:$0xff]
        %v143 = vld [vmem:[%s141 + $0x8] sm:$0xff]
        %s144 = scalar_lea.vmem %s141, 16
        %v145 = vld [vmem:[%s144] sm:$0xff]
        %v146 = vld [vmem:[%s144 + $0x8] sm:$0xff]
        %v147 = vadd.f32 %v142, %v145
        %v148 = vadd.f32 %v143, %v146
        %v149 = vmax.f32 %v142, %v145
        %v150 = vmax.f32 %v143, %v146
        %s151 = scalar_lea.vmem %s141, 32
        %v152 = vld [vmem:[%s151] sm:$0xff]
        %v153 = vld [vmem:[%s151 + $0x8] sm:$0xff]
        %v154 = vadd.f32 %v147, %v152
        %v155 = vadd.f32 %v148, %v153
        %v156 = vmax.f32 %v149, %v152
        %v157 = vmax.f32 %v150, %v153
        %s158 = scalar_lea.vmem %s141, 48
        %v159 = vld [vmem:[%s158] sm:$0xff]
        %v160 = vld [vmem:[%s158 + $0x8] sm:$0xff]
        %v161 = vadd.f32 %v154, %v159
        %v162 = vadd.f32 %v155, %v160
        %v163 = vmax.f32 %v156, %v159
        %v164 = vmax.f32 %v157, %v160
        %v165 = vmul.f32 %v161, 0.25
        %v166 = vmul.f32 %v162, 0.25
        %vm167 = vcmask 130048
        %168 = vst.msk [vmem:[#allocation2] sm:$0xff] %vm167, 0.0
        %169 = vst.msk [vmem:[#allocation2 + $0x8] sm:$0xff] %vm167, 0.0
        %vm170 = vcmask 123904
        %171 = vst.msk [vmem:[#allocation2 + $0x10] sm:$0x3] %vm170, 0.0
        %172 = vst.msk [vmem:[#allocation2 + $0x18] sm:$0xff] %vm167, 0.0
        %173 = vst.msk [vmem:[#allocation2 + $0x20] sm:$0xff] %vm167, 0.0
        %174 = vst.msk [vmem:[#allocation2 + $0x28] sm:$0x3] %vm170, 0.0
        %175 = vst.msk [vmem:[#allocation2 + $0x1] sm:$0xff] %vm167, %v165
        %176 = vst.msk [vmem:[#allocation2 + $0x9] sm:$0xff] %vm167, %v166
        %s177 = scalar_lea.vmem [#allocation2], 24
        %178 = vst.msk [vmem:[%s177 + $0x1] sm:$0xff] %vm167, %v163
        %179 = vst.msk [vmem:[%s177 + $0x9] sm:$0xff] %vm167, %v164
        %v180 = vld [vmem:[#allocation2] sm:$0xff]
        %v181 = vld [vmem:[#allocation2 + $0x8] sm:$0xff]
        %v182 = vld [vmem:[%s1] sm:$0xff]
        %v183 = vld [vmem:[%s1 + $0x8] sm:$0xff]
        %v184 = vld [vmem:[#allocation2 + $0x1] sm:$0xff]
        %v185 = vld [vmem:[#allocation2 + $0x9] sm:$0xff]
        %s186 = scalar_lea.vmem %s1, 16
        %v187 = vld [vmem:[%s186] sm:$0xff]
        %v188 = vld [vmem:[%s186 + $0x8] sm:$0xff]
        %v190 = vsel %vm167, %v184, 0
        %v193 = vsel %vm167, %v185, 0
        %195 = vmatprep.subr.mxu0 0.0
        %196 = vmatpush1.msra.mxu0 %v187
        %197 = vmatprep.subr.mxu0 0.0
        %198 = vmatpush1.msra.mxu0 %v188
        %199 = vmatprep.subr.mxu0 0.0
        %200 = vmatpush1.msra.mxu0 0.0
        %201 = vmatprep.subr.mxu0 0.0
        %202 = vmatpush1.msra.mxu0 0.0
        %203 = vmatprep.subr.mxu0 0.0
        %204 = vmatpush1.msra.mxu0 0.0
        %205 = vmatprep.subr.mxu0 0.0
        %206 = vmatpush1.msra.mxu0 0.0
        %207 = vmatprep.subr.mxu0 0.0
        %208 = vmatpush1.msra.mxu0 0.0
        %209 = vmatprep.subr.mxu0 0.0
        %210 = vmatpush1.msra.mxu0 0.0
        %211 = vmatprep.subr.mxu0 0.0
        %212 = vmatpush1.msra.mxu0 0.0
        %213 = vmatprep.subr.mxu0 0.0
        %214 = vmatpush1.msra.mxu0 0.0
        %215 = vmatprep.subr.mxu0 0.0
        %216 = vmatpush1.msra.mxu0 0.0
        %217 = vmatprep.subr.mxu0 0.0
        %218 = vmatpush1.msra.mxu0 0.0
        %219 = vmatprep.subr.mxu0 0.0
        %220 = vmatpush1.msra.mxu0 0.0
        %221 = vmatprep.subr.mxu0 0.0
        %222 = vmatpush1.msra.mxu0 0.0
        %223 = vmatprep.subr.mxu0 0.0
        %224 = vmatpush1.msra.mxu0 0.0
        %225 = vmatprep.subr.mxu0 0.0
        %226 = vmatpush1.msra.mxu0 0.0
        %227 = vmatprep.subr.mxu0 0.0
        %228 = vmatpush1.msra.mxu0 0.0
        %229 = vmatprep.subr.mxu0 0.0
        %230 = vmatpush1.msra.mxu0 0.0
        %231 = vmatprep.subr.mxu0 0.0
        %232 = vmatpush1.msra.mxu0 0.0
        %233 = vmatprep.subr.mxu0 0.0
        %234 = vmatpush1.msra.mxu0 0.0
        %235 = vmatprep.subr.mxu0 0.0
        %236 = vmatpush1.msra.mxu0 0.0
        %237 = vmatprep.subr.mxu0 0.0
        %238 = vmatpush1.msra.mxu0 0.0
        %239 = vmatprep.subr.mxu0 0.0
        %240 = vmatpush1.msra.mxu0 0.0
        %241 = vmatprep.subr.mxu0 0.0
        %242 = vmatpush1.msra.mxu0 0.0
        %243 = vmatprep.subr.mxu0 0.0
        %244 = vmatpush1.msra.mxu0 0.0
        %245 = vmatprep.subr.mxu0 0.0
        %246 = vmatpush1.msra.mxu0 0.0
        %247 = vmatprep.subr.mxu0 0.0
        %248 = vmatpush1.msra.mxu0 0.0
        %249 = vmatprep.subr.mxu0 0.0
        %250 = vmatpush1.msra.mxu0 0.0
        %251 = vmatprep.subr.mxu0 0.0
        %252 = vmatpush1.msra.mxu0 0.0
        %253 = vmatprep.subr.mxu0 0.0
        %254 = vmatpush1.msra.mxu0 0.0
        %255 = vmatprep.subr.mxu0 0.0
        %256 = vmatpush1.msra.mxu0 0.0
        %257 = vmatprep.subr.mxu0 0.0
        %258 = vmatpush1.msra.mxu0 0.0
        %259 = vmatprep.mubr.f32.mxu0 0.0
        %260 = vmatmul.mubr.f32.gmra.mrb[0].mxu0 %v190
        %v261 = vpop.f32.mrb[0].mxu0
        %v262 = vadd.f32 0.0, %v261
        %v263 = vpop.f32.mrb[0].mxu0
        %264 = vmatprep.mubr.f32.mxu0 0.0
        %265 = vmatmul.mubr.f32.gmra.mrb[0].mxu0 %v193
        %v266 = vpop.f32.mrb[0].mxu0
        %v267 = vadd.f32 0.0, %v266
        %v268 = vpop.f32.mrb[0].mxu0
        %269 = vdwg.mxu0
        %v271 = vsel %vm167, %v180, 0
        %v274 = vsel %vm167, %v181, 0
        %276 = vmatprep.subr.mxu0 0.0
        %277 = vmatpush1.msra.mxu0 %v182
        %278 = vmatprep.subr.mxu0 0.0
        %279 = vmatpush1.msra.mxu0 %v183
        %280 = vmatprep.subr.mxu0 0.0
        %281 = vmatpush1.msra.mxu0 0.0
        %282 = vmatprep.subr.mxu0 0.0
        %283 = vmatpush1.msra.mxu0 0.0
        %284 = vmatprep.subr.mxu0 0.0
        %285 = vmatpush1.msra.mxu0 0.0
        %286 = vmatprep.subr.mxu0 0.0
        %287 = vmatpush1.msra.mxu0 0.0
        %288 = vmatprep.subr.mxu0 0.0
        %289 = vmatpush1.msra.mxu0 0.0
        %290 = vmatprep.subr.mxu0 0.0
        %291 = vmatpush1.msra.mxu0 0.0
        %292 = vmatprep.subr.mxu0 0.0
        %293 = vmatpush1.msra.mxu0 0.0
        %294 = vmatprep.subr.mxu0 0.0
        %295 = vmatpush1.msra.mxu0 0.0
        %296 = vmatprep.subr.mxu0 0.0
        %297 = vmatpush1.msra.mxu0 0.0
        %298 = vmatprep.subr.mxu0 0.0
        %299 = vmatpush1.msra.mxu0 0.0
        %300 = vmatprep.subr.mxu0 0.0
        %301 = vmatpush1.msra.mxu0 0.0
        %302 = vmatprep.subr.mxu0 0.0
        %303 = vmatpush1.msra.mxu0 0.0
        %304 = vmatprep.subr.mxu0 0.0
        %305 = vmatpush1.msra.mxu0 0.0
        %306 = vmatprep.subr.mxu0 0.0
        %307 = vmatpush1.msra.mxu0 0.0
        %308 = vmatprep.subr.mxu0 0.0
        %309 = vmatpush1.msra.mxu0 0.0
        %310 = vmatprep.subr.mxu0 0.0
        %311 = vmatpush1.msra.mxu0 0.0
        %312 = vmatprep.subr.mxu0 0.0
        %313 = vmatpush1.msra.mxu0 0.0
        %314 = vmatprep.subr.mxu0 0.0
        %315 = vmatpush1.msra.mxu0 0.0
        %316 = vmatprep.subr.mxu0 0.0
        %317 = vmatpush1.msra.mxu0 0.0
        %318 = vmatprep.subr.mxu0 0.0
        %319 = vmatpush1.msra.mxu0 0.0
        %320 = vmatprep.subr.mxu0 0.0
        %321 = vmatpush1.msra.mxu0 0.0
        %322 = vmatprep.subr.mxu0 0.0
        %323 = vmatpush1.msra.mxu0 0.0
        %324 = vmatprep.subr.mxu0 0.0
        %325 = vmatpush1.msra.mxu0 0.0
        %326 = vmatprep.subr.mxu0 0.0
        %327 = vmatpush1.msra.mxu0 0.0
        %328 = vmatprep.subr.mxu0 0.0
        %329 = vmatpush1.msra.mxu0 0.0
        %330 = vmatprep.subr.mxu0 0.0
        %331 = vmatpush1.msra.mxu0 0.0
        %332 = vmatprep.subr.mxu0 0.0
        %333 = vmatpush1.msra.mxu0 0.0
        %334 = vmatprep.subr.mxu0 0.0
        %335 = vmatpush1.msra.mxu0 0.0
        %336 = vmatprep.subr.mxu0 0.0
        %337 = vmatpush1.msra.mxu0 0.0
        %338 = vmatprep.subr.mxu0 0.0
        %339 = vmatpush1.msra.mxu0 0.0
        %340 = vmatprep.mubr.f32.mxu0 0.0
        %341 = vmatmul.mubr.f32.gmra.mrb[0].mxu0 %v271
        %v342 = vpop.f32.mrb[0].mxu0
        %v343 = vadd.f32 %v262, %v342
        %v344 = vpop.f32.mrb[0].mxu0
        %345 = vmatprep.mubr.f32.mxu0 0.0
        %346 = vmatmul.mubr.f32.gmra.mrb[0].mxu0 %v274
        %v347 = vpop.f32.mrb[0].mxu0
        %v348 = vadd.f32 %v267, %v347
        %v349 = vpop.f32.mrb[0].mxu0
        %350 = vdwg.mxu0
        %v351 = vld [vmem:[#allocation2 + $0x2] sm:$0xff]
        %v352 = vld [vmem:[#allocation2 + $0xa] sm:$0xff]
        %s353 = scalar_lea.vmem %s1, 32
        %v354 = vld [vmem:[%s353] sm:$0xff]
        %v355 = vld [vmem:[%s353 + $0x8] sm:$0xff]
        %v357 = vsel %vm167, %v351, 0
        %v360 = vsel %vm167, %v352, 0
        %362 = vmatprep.subr.mxu0 0.0
        %363 = vmatpush1.msra.mxu0 %v354
        %364 = vmatprep.subr.mxu0 0.0
        %365 = vmatpush1.msra.mxu0 %v355
        %366 = vmatprep.subr.mxu0 0.0
        %367 = vmatpush1.msra.mxu0 0.0
        %368 = vmatprep.subr.mxu0 0.0
        %369 = vmatpush1.msra.mxu0 0.0
        %370 = vmatprep.subr.mxu0 0.0
        %371 = vmatpush1.msra.mxu0 0.0
        %372 = vmatprep.subr.mxu0 0.0
        %373 = vmatpush1.msra.mxu0 0.0
        %374 = vmatprep.subr.mxu0 0.0
        %375 = vmatpush1.msra.mxu0 0.0
        %376 = vmatprep.subr.mxu0 0.0
        %377 = vmatpush1.msra.mxu0 0.0
        %378 = vmatprep.subr.mxu0 0.0
        %379 = vmatpush1.msra.mxu0 0.0
        %380 = vmatprep.subr.mxu0 0.0
        %381 = vmatpush1.msra.mxu0 0.0
        %382 = vmatprep.subr.mxu0 0.0
        %383 = vmatpush1.msra.mxu0 0.0
        %384 = vmatprep.subr.mxu0 0.0
        %385 = vmatpush1.msra.mxu0 0.0
        %386 = vmatprep.subr.mxu0 0.0
        %387 = vmatpush1.msra.mxu0 0.0
        %388 = vmatprep.subr.mxu0 0.0
        %389 = vmatpush1.msra.mxu0 0.0
        %390 = vmatprep.subr.mxu0 0.0
        %391 = vmatpush1.msra.mxu0 0.0
        %392 = vmatprep.subr.mxu0 0.0
        %393 = vmatpush1.msra.mxu0 0.0
        %394 = vmatprep.subr.mxu0 0.0
        %395 = vmatpush1.msra.mxu0 0.0
        %396 = vmatprep.subr.mxu0 0.0
        %397 = vmatpush1.msra.mxu0 0.0
        %398 = vmatprep.subr.mxu0 0.0
        %399 = vmatpush1.msra.mxu0 0.0
        %400 = vmatprep.subr.mxu0 0.0
        %401 = vmatpush1.msra.mxu0 0.0
        %402 = vmatprep.subr.mxu0 0.0
        %403 = vmatpush1.msra.mxu0 0.0
        %404 = vmatprep.subr.mxu0 0.0
        %405 = vmatpush1.msra.mxu0 0.0
        %406 = vmatprep.subr.mxu0 0.0
        %407 = vmatpush1.msra.mxu0 0.0
        %408 = vmatprep.subr.mxu0 0.0
        %409 = vmatpush1.msra.mxu0 0.0
        %410 = vmatprep.subr.mxu0 0.0
        %411 = vmatpush1.msra.mxu0 0.0
        %412 = vmatprep.subr.mxu0 0.0
        %413 = vmatpush1.msra.mxu0 0.0
        %414 = vmatprep.subr.mxu0 0.0
        %415 = vmatpush1.msra.mxu0 0.0
        %416 = vmatprep.subr.mxu0 0.0
        %417 = vmatpush1.msra.mxu0 0.0
        %418 = vmatprep.subr.mxu0 0.0
        %419 = vmatpush1.msra.mxu0 0.0
        %420 = vmatprep.subr.mxu0 0.0
        %421 = vmatpush1.msra.mxu0 0.0
        %422 = vmatprep.subr.mxu0 0.0
        %423 = vmatpush1.msra.mxu0 0.0
        %424 = vmatprep.subr.mxu0 0.0
        %425 = vmatpush1.msra.mxu0 0.0
        %426 = vmatprep.mubr.f32.mxu0 0.0
        %427 = vmatmul.mubr.f32.gmra.mrb[0].mxu0 %v357
        %v428 = vpop.f32.mrb[0].mxu0
        %v429 = vadd.f32 0.0, %v428
        %v430 = vpop.f32.mrb[0].mxu0
        %431 = vmatprep.mubr.f32.mxu0 0.0
        %432 = vmatmul.mubr.f32.gmra.mrb[0].mxu0 %v360
        %v433 = vpop.f32.mrb[0].mxu0
        %v434 = vadd.f32 0.0, %v433
        %v435 = vpop.f32.mrb[0].mxu0
        %436 = vdwg.mxu0
        %v437 = vadd.f32 %v343, %v429
        %v438 = vadd.f32 %v348, %v434
        %v439 = vld [vmem:[%s177] sm:$0xff]
        %v440 = vld [vmem:[%s177 + $0x8] sm:$0xff]
        %s441 = scalar_lea.vmem %s1, 48
        %v442 = vld [vmem:[%s441] sm:$0xff]
        %v443 = vld [vmem:[%s441 + $0x8] sm:$0xff]
        %v445 = vsel %vm167, %v439, 0
        %v448 = vsel %vm167, %v440, 0
        %450 = vmatprep.subr.mxu0 0.0
        %451 = vmatpush1.msra.mxu0 %v442
        %452 = vmatprep.subr.mxu0 0.0
        %453 = vmatpush1.msra.mxu0 %v443
        %454 = vmatprep.subr.mxu0 0.0
        %455 = vmatpush1.msra.mxu0 0.0
        %456 = vmatprep.subr.mxu0 0.0
        %457 = vmatpush1.msra.mxu0 0.0
        %458 = vmatprep.subr.mxu0 0.0
        %459 = vmatpush1.msra.mxu0 0.0
        %460 = vmatprep.subr.mxu0 0.0
        %461 = vmatpush1.msra.mxu0 0.0
        %462 = vmatprep.subr.mxu0 0.0
        %463 = vmatpush1.msra.mxu0 0.0
        %464 = vmatprep.subr.mxu0 0.0
        %465 = vmatpush1.msra.mxu0 0.0
        %466 = vmatprep.subr.mxu0 0.0
        %467 = vmatpush1.msra.mxu0 0.0
        %468 = vmatprep.subr.mxu0 0.0
        %469 = vmatpush1.msra.mxu0 0.0
        %470 = vmatprep.subr.mxu0 0.0
        %471 = vmatpush1.msra.mxu0 0.0
        %472 = vmatprep.subr.mxu0 0.0
        %473 = vmatpush1.msra.mxu0 0.0
        %474 = vmatprep.subr.mxu0 0.0
        %475 = vmatpush1.msra.mxu0 0.0
        %476 = vmatprep.subr.mxu0 0.0
        %477 = vmatpush1.msra.mxu0 0.0
        %478 = vmatprep.subr.mxu0 0.0
        %479 = vmatpush1.msra.mxu0 0.0
        %480 = vmatprep.subr.mxu0 0.0
        %481 = vmatpush1.msra.mxu0 0.0
        %482 = vmatprep.subr.mxu0 0.0
        %483 = vmatpush1.msra.mxu0 0.0
        %484 = vmatprep.subr.mxu0 0.0
        %485 = vmatpush1.msra.mxu0 0.0
        %486 = vmatprep.subr.mxu0 0.0
        %487 = vmatpush1.msra.mxu0 0.0
        %488 = vmatprep.subr.mxu0 0.0
        %489 = vmatpush1.msra.mxu0 0.0
        %490 = vmatprep.subr.mxu0 0.0
        %491 = vmatpush1.msra.mxu0 0.0
        %492 = vmatprep.subr.mxu0 0.0
        %493 = vmatpush1.msra.mxu0 0.0
        %494 = vmatprep.subr.mxu0 0.0
        %495 = vmatpush1.msra.mxu0 0.0
        %496 = vmatprep.subr.mxu0 0.0
        %497 = vmatpush1.msra.mxu0 0.0
        %498 = vmatprep.subr.mxu0 0.0
        %499 = vmatpush1.msra.mxu0 0.0
        %500 = vmatprep.subr.mxu0 0.0
        %501 = vmatpush1.msra.mxu0 0.0
        %502 = vmatprep.subr.mxu0 0.0
        %503 = vmatpush1.msra.mxu0 0.0
        %504 = vmatprep.subr.mxu0 0.0
        %505 = vmatpush1.msra.mxu0 0.0
        %506 = vmatprep.subr.mxu0 0.0
        %507 = vmatpush1.msra.mxu0 0.0
        %508 = vmatprep.subr.mxu0 0.0
        %509 = vmatpush1.msra.mxu0 0.0
        %510 = vmatprep.subr.mxu0 0.0
        %511 = vmatpush1.msra.mxu0 0.0
        %512 = vmatprep.subr.mxu0 0.0
        %513 = vmatpush1.msra.mxu0 0.0
        %514 = vmatprep.mubr.f32.mxu0 0.0
        %515 = vmatmul.mubr.f32.gmra.mrb[0].mxu0 %v445
        %v516 = vpop.f32.mrb[0].mxu0
        %v517 = vadd.f32 0.0, %v516
        %v518 = vpop.f32.mrb[0].mxu0
        %519 = vmatprep.mubr.f32.mxu0 0.0
        %520 = vmatmul.mubr.f32.gmra.mrb[0].mxu0 %v448
        %v521 = vpop.f32.mrb[0].mxu0
        %v522 = vadd.f32 0.0, %v521
        %v523 = vpop.f32.mrb[0].mxu0
        %524 = vdwg.mxu0
        %v525 = vadd.f32 %v437, %v517
        %v526 = vadd.f32 %v438, %v522
        %v527 = vld [vmem:[%s177 + $0x1] sm:$0xff]
        %v528 = vld [vmem:[%s177 + $0x9] sm:$0xff]
        %s529 = scalar_lea.vmem %s1, 64
        %v530 = vld [vmem:[%s529] sm:$0xff]
        %v531 = vld [vmem:[%s529 + $0x8] sm:$0xff]
        %v533 = vsel %vm167, %v527, 0
        %v536 = vsel %vm167, %v528, 0
        %538 = vmatprep.subr.mxu0 0.0
        %539 = vmatpush1.msra.mxu0 %v530
        %540 = vmatprep.subr.mxu0 0.0
        %541 = vmatpush1.msra.mxu0 %v531
        %542 = vmatprep.subr.mxu0 0.0
        %543 = vmatpush1.msra.mxu0 0.0
        %544 = vmatprep.subr.mxu0 0.0
        %545 = vmatpush1.msra.mxu0 0.0
        %546 = vmatprep.subr.mxu0 0.0
        %547 = vmatpush1.msra.mxu0 0.0
        %548 = vmatprep.subr.mxu0 0.0
        %549 = vmatpush1.msra.mxu0 0.0
        %550 = vmatprep.subr.mxu0 0.0
        %551 = vmatpush1.msra.mxu0 0.0
        %552 = vmatprep.subr.mxu0 0.0
        %553 = vmatpush1.msra.mxu0 0.0
        %554 = vmatprep.subr.mxu0 0.0
        %555 = vmatpush1.msra.mxu0 0.0
        %556 = vmatprep.subr.mxu0 0.0
        %557 = vmatpush1.msra.mxu0 0.0
        %558 = vmatprep.subr.mxu0 0.0
        %559 = vmatpush1.msra.mxu0 0.0
        %560 = vmatprep.subr.mxu0 0.0
        %561 = vmatpush1.msra.mxu0 0.0
        %562 = vmatprep.subr.mxu0 0.0
        %563 = vmatpush1.msra.mxu0 0.0
        %564 = vmatprep.subr.mxu0 0.0
        %565 = vmatpush1.msra.mxu0 0.0
        %566 = vmatprep.subr.mxu0 0.0
        %567 = vmatpush1.msra.mxu0 0.0
        %568 = vmatprep.subr.mxu0 0.0
        %569 = vmatpush1.msra.mxu0 0.0
        %570 = vmatprep.subr.mxu0 0.0
        %571 = vmatpush1.msra.mxu0 0.0
        %572 = vmatprep.subr.mxu0 0.0
        %573 = vmatpush1.msra.mxu0 0.0
        %574 = vmatprep.subr.mxu0 0.0
        %575 = vmatpush1.msra.mxu0 0.0
        %576 = vmatprep.subr.mxu0 0.0
        %577 = vmatpush1.msra.mxu0 0.0
        %578 = vmatprep.subr.mxu0 0.0
        %579 = vmatpush1.msra.mxu0 0.0
        %580 = vmatprep.subr.mxu0 0.0
        %581 = vmatpush1.msra.mxu0 0.0
        %582 = vmatprep.subr.mxu0 0.0
        %583 = vmatpush1.msra.mxu0 0.0
        %584 = vmatprep.subr.mxu0 0.0
        %585 = vmatpush1.msra.mxu0 0.0
        %586 = vmatprep.subr.mxu0 0.0
        %587 = vmatpush1.msra.mxu0 0.0
        %588 = vmatprep.subr.mxu0 0.0
        %589 = vmatpush1.msra.mxu0 0.0
        %590 = vmatprep.subr.mxu0 0.0
        %591 = vmatpush1.msra.mxu0 0.0
        %592 = vmatprep.subr.mxu0 0.0
        %593 = vmatpush1.msra.mxu0 0.0
        %594 = vmatprep.subr.mxu0 0.0
        %595 = vmatpush1.msra.mxu0 0.0
        %596 = vmatprep.subr.mxu0 0.0
        %597 = vmatpush1.msra.mxu0 0.0
        %598 = vmatprep.subr.mxu0 0.0
        %599 = vmatpush1.msra.mxu0 0.0
        %600 = vmatprep.subr.mxu0 0.0
        %601 = vmatpush1.msra.mxu0 0.0
        %602 = vmatprep.mubr.f32.mxu0 0.0
        %603 = vmatmul.mubr.f32.gmra.mrb[0].mxu0 %v533
        %v604 = vpop.f32.mrb[0].mxu0
        %v605 = vadd.f32 0.0, %v604
        %v606 = vpop.f32.mrb[0].mxu0
        %607 = vmatprep.mubr.f32.mxu0 0.0
        %608 = vmatmul.mubr.f32.gmra.mrb[0].mxu0 %v536
        %v609 = vpop.f32.mrb[0].mxu0
        %v610 = vadd.f32 0.0, %v609
        %v611 = vpop.f32.mrb[0].mxu0
        %612 = vdwg.mxu0
        %v613 = vadd.f32 %v525, %v605
        %v614 = vadd.f32 %v526, %v610
        %v615 = vld [vmem:[%s177 + $0x2] sm:$0xff]
        %v616 = vld [vmem:[%s177 + $0xa] sm:$0xff]
        %s617 = scalar_lea.vmem %s1, 80
        %v618 = vld [vmem:[%s617] sm:$0xff]
        %v619 = vld [vmem:[%s617 + $0x8] sm:$0xff]
        %v621 = vsel %vm167, %v615, 0
        %v624 = vsel %vm167, %v616, 0
        %626 = vmatprep.subr.mxu0 0.0
        %627 = vmatpush1.msra.mxu0 %v618
        %628 = vmatprep.subr.mxu0 0.0
        %629 = vmatpush1.msra.mxu0 %v619
        %630 = vmatprep.subr.mxu0 0.0
        %631 = vmatpush1.msra.mxu0 0.0
        %632 = vmatprep.subr.mxu0 0.0
        %633 = vmatpush1.msra.mxu0 0.0
        %634 = vmatprep.subr.mxu0 0.0
        %635 = vmatpush1.msra.mxu0 0.0
        %636 = vmatprep.subr.mxu0 0.0
        %637 = vmatpush1.msra.mxu0 0.0
        %638 = vmatprep.subr.mxu0 0.0
        %639 = vmatpush1.msra.mxu0 0.0
        %640 = vmatprep.subr.mxu0 0.0
        %641 = vmatpush1.msra.mxu0 0.0
        %642 = vmatprep.subr.mxu0 0.0
        %643 = vmatpush1.msra.mxu0 0.0
        %644 = vmatprep.subr.mxu0 0.0
        %645 = vmatpush1.msra.mxu0 0.0
        %646 = vmatprep.subr.mxu0 0.0
        %647 = vmatpush1.msra.mxu0 0.0
        %648 = vmatprep.subr.mxu0 0.0
        %649 = vmatpush1.msra.mxu0 0.0
        %650 = vmatprep.subr.mxu0 0.0
        %651 = vmatpush1.msra.mxu0 0.0
        %652 = vmatprep.subr.mxu0 0.0
        %653 = vmatpush1.msra.mxu0 0.0
        %654 = vmatprep.subr.mxu0 0.0
        %655 = vmatpush1.msra.mxu0 0.0
        %656 = vmatprep.subr.mxu0 0.0
        %657 = vmatpush1.msra.mxu0 0.0
        %658 = vmatprep.subr.mxu0 0.0
        %659 = vmatpush1.msra.mxu0 0.0
        %660 = vmatprep.subr.mxu0 0.0
        %661 = vmatpush1.msra.mxu0 0.0
        %662 = vmatprep.subr.mxu0 0.0
        %663 = vmatpush1.msra.mxu0 0.0
        %664 = vmatprep.subr.mxu0 0.0
        %665 = vmatpush1.msra.mxu0 0.0
        %666 = vmatprep.subr.mxu0 0.0
        %667 = vmatpush1.msra.mxu0 0.0
        %668 = vmatprep.subr.mxu0 0.0
        %669 = vmatpush1.msra.mxu0 0.0
        %670 = vmatprep.subr.mxu0 0.0
        %671 = vmatpush1.msra.mxu0 0.0
        %672 = vmatprep.subr.mxu0 0.0
        %673 = vmatpush1.msra.mxu0 0.0
        %674 = vmatprep.subr.mxu0 0.0
        %675 = vmatpush1.msra.mxu0 0.0
        %676 = vmatprep.subr.mxu0 0.0
        %677 = vmatpush1.msra.mxu0 0.0
        %678 = vmatprep.subr.mxu0 0.0
        %679 = vmatpush1.msra.mxu0 0.0
        %680 = vmatprep.subr.mxu0 0.0
        %681 = vmatpush1.msra.mxu0 0.0
        %682 = vmatprep.subr.mxu0 0.0
        %683 = vmatpush1.msra.mxu0 0.0
        %684 = vmatprep.subr.mxu0 0.0
        %685 = vmatpush1.msra.mxu0 0.0
        %686 = vmatprep.subr.mxu0 0.0
        %687 = vmatpush1.msra.mxu0 0.0
        %688 = vmatprep.subr.mxu0 0.0
        %689 = vmatpush1.msra.mxu0 0.0
        %690 = vmatprep.mubr.f32.mxu0 0.0
        %691 = vmatmul.mubr.f32.gmra.mrb[0].mxu0 %v621
        %v692 = vpop.f32.mrb[0].mxu0
        %v693 = vadd.f32 0.0, %v692
        %v694 = vpop.f32.mrb[0].mxu0
        %695 = vmatprep.mubr.f32.mxu0 0.0
        %696 = vmatmul.mubr.f32.gmra.mrb[0].mxu0 %v624
        %v697 = vpop.f32.mrb[0].mxu0
        %v698 = vadd.f32 0.0, %v697
        %v699 = vpop.f32.mrb[0].mxu0
        %700 = vdwg.mxu0
        %v701 = vadd.f32 %v613, %v693
        %v702 = vadd.f32 %v614, %v698
        %v703 = vxor.u32 %v701, 2147483648
        %v704 = vxor.u32 %v702, 2147483648
        %v705 = vmul.f32 %v703, 1.442695
        %v706 = vpow.pop %v705
        %v707 = vmul.f32 %v704, 1.442695
        %v708 = vpow.pop %v707
        %v709 = vadd.f32 %v706, 1.0
        %v710 = vadd.f32 %v708, 1.0
        %v711 = vrcp.pop %v709
        %v712 = vmul.f32 1.0, %v711
        %v713 = vrcp.pop %v710
        %v714 = vmul.f32 1.0, %v713
        %715 = vst.msk [vmem:[%s136] sm:$0xff] %vm167, %v712
        %716 = vst.msk [vmem:[%s136 + $0x8] sm:$0xff] %vm167, %v714
        %s717 = sand.u32 %s71, 1
        %s718 = scalar_lea.sflag [#allocation4], %s717
        %s719 = sand.u32 %s71, 1
        %s720 = smul.addr %s719, 16
        %s721 = scalar_lea.vmem [#allocation3], %s720
        // Predicated region
        $region29: #{spatial_attention.1} parent=27 // pred_check
          %p722 = pneg %p81
        $region30: #{spatial_attention.1} parent=27 // pred_check_branch
          %724 = sbr.rel (%p722) target = $region32
        $region31: #{spatial_attention.1} parent=27 // pred_region
          %s726 = ssub.s32 256, 256
          %727 = vsyncadd %s718, %s726
          %s728 = smul.addr %s16, 2
          %s729 = smul.addr %s728, 128
          %s730 = scalar_lea.hbm %s2, %s729
          %s731 = sshll.u32 %s721, 4
          %s732 = int_to_ptr.vmem [resolvable:$true] %s731
          %737 = dma.vmem_to_hbm [thread:$0]  %s732, 256, %s730, %s718, 128, 128, 8
        $region32: #{spatial_attention.1} parent=27 // pred_fallthru
          _
      $region28: #{spatial_attention.1} parent=5 // pred_fallthru
        _
      %p738 = scmp.le.s32.totalorder 2, %s11
      // Predicated region
      $region33: #{spatial_attention.1} parent=5 // pred_check
        %p739 = pneg %p738
      $region34: #{spatial_attention.1} parent=5 // pred_check_branch
        %741 = sbr.rel (%p739) target = $region36
      $region35: #{spatial_attention.1} parent=5 // pred_region
        %s742 = ssub.s32 %s11, 2
        // Predicated region
        $region37: #{spatial_attention.1} parent=35 // pred_check
          %p743 = pneg %p87
        $region38: #{spatial_attention.1} parent=35 // pred_check_branch
          %745 = sbr.rel (%p743) target = $region40
        $region39: #{spatial_attention.1} parent=35 // pred_region
          %s746 = sand.u32 %s72, 1
          %s747 = scalar_lea.sflag [#allocation4], %s746
          %s748 = sand.u32 %s72, 1
          %s749 = smul.addr %s748, 16
          %s750 = scalar_lea.vmem [#allocation3], %s749
          %751 = dma.done %s747, 256
        $region40: #{spatial_attention.1} parent=35 // pred_fallthru
          _
      $region36: #{spatial_attention.1} parent=5 // pred_fallthru
        _
    $region6: #{spatial_attention.1} parent=1 // loop_footer
      %s15 = sadd.s32 1, %s11
    $region7: #{spatial_attention.1} parent=1 // loop_footer_branch
      %10 = sbr.rel target = $region3
    $region8: #{spatial_attention.1} parent=1 // loop_exit
      _
    %752 = vsyncpa [#allocation4], 1
    %s753 = scalar_lea.sflag [#allocation4], 1
    %754 = vsyncpa %s753, 1

</llo_original>
